<compile_context>
chip_gen: v7x
topology: tpu7x:2x2x1
jax: 0.10.0
libtpu: 0.0.40
codegen_flags: <defaults>
</compile_context>

<pallas_src>
import functools
import re
from typing import NamedTuple

import jax
import jax.numpy as jnp
from jax.experimental import pallas as pl
from jax.experimental.pallas import tpu as pltpu

NEG_SLOPE = 0.01   # nn.LeakyReLU() default negative_slope
LANE = 128         # TPU lane width (minimum feature-dim padding)

_BUFFERED1_ERRORS = (TypeError, NotImplementedError, pltpu.LoweringException)


# --------------------------------------------------------------------------- utils
def _leaky_relu(x):
    return jnp.where(x > 0, x, NEG_SLOPE * x)


def _round_up(n, m):
    return ((n + m - 1) // m) * m


def _pad_to(a, shape, dtype):
    a = a.astype(dtype)
    pads = [(0, s - d) for d, s in zip(a.shape, shape)]
    if any(p for _, p in pads):
        a = jnp.pad(a, pads)
    return a


def _tpu_generation():
    """Best-effort TPU generation (5 = v5e, 6 = v6e, 7 = v7x, ...)."""
    try:
        kind = jax.devices()[0].device_kind
    except Exception:
        return 6
    m = re.search(r"(\d+)", kind)
    return int(m.group(1)) if m else 6


def _pad_dim(n, gen):
    """Feature-dim padding: one vreg width minimum; 256-multiples on v6e/v7x
    (native 256x256 MXU), 128-multiples on older chips."""
    if n <= LANE:
        return LANE
    return _round_up(n, 256 if gen >= 6 else 128)


def _default_block_b(batch, gen):
    """Batch tile: cap at 512 rows (amortizes the ~0.35us/step overhead, ~85% of
    HBM roofline for mem-bound tiles).  Small batches get a single tile (v5e/v6e
    have one TensorCore, so extra grid steps are pure overhead there).  On v7x
    (2 TCs) split into >=2 grid steps only when each half still has >=256 rows."""
    bb = min(512, _round_up(batch, 8))
    if gen >= 7 and batch >= 512:
        bb = min(bb, max(256, _round_up(pl.cdiv(batch, 2), 128)))
    return max(8, bb)


def _vmem_cap_bytes(gen):
    # v5e/v6e have 128 MiB physical VMEM; v7x only 64 MiB per TensorCore.
    return (56 if gen >= 7 else 100) * 1024 * 1024


def _resident_weight_bytes(Dp, Hp, Cp):
    return (Dp * Hp + Hp * Hp + Hp * Cp) * 2 + (2 * Hp + Cp) * 4


def _resident_vmem_bytes(bb, Dp, Hp, Cp, x_dtype):
    xi = jnp.dtype(x_dtype).itemsize
    weights = _resident_weight_bytes(Dp, Hp, Cp)          # single-buffered
    acts = 2 * bb * Dp * xi + 2 * bb * Cp * xi            # x / out tiles, double-buffered
    inter = 2 * bb * Hp * 4 + bb * Hp * 2                 # f32 hidden activations + bf16 copy
    return int((weights + acts + inter) * 1.25) + (2 << 20)


def _hidden_tiled_vmem_bytes(bb, Dp, Hp, Cp, tk, x_dtype):
    xi = jnp.dtype(x_dtype).itemsize
    streamed = 2 * (Dp * tk * 2 + tk * Hp * 2 + tk * 4)   # w1/w2/b1 tiles, double-buffered
    resident = Hp * Cp * 2 + (Hp + Cp) * 4                # w3 bf16 + b2/b3 f32
    acts = 2 * bb * Dp * xi + 2 * bb * Cp * xi
    acc = bb * Hp * 4
    inter = bb * tk * 4 + bb * tk * 2 + bb * Hp * 2
    return int((streamed + resident + acts + acc + inter) * 1.25) + (2 << 20)


def _default_hidden_tile(Hp, Dp, cap_bytes):
    best = 128
    for tk in (256, 512, 1024):
        if Hp % tk == 0 and 2 * 2 * (Dp * tk + tk * Hp) <= cap_bytes // 3:
            best = tk
    return best


# --------------------------------------------------------------------------- kernels
def _mlp_resident_kernel(x_ref, w1_ref, b1_ref, w2_ref, b2_ref, w3_ref, b3_ref, o_ref):
    # bf16 operands on the MXU, f32 accumulation; bias add / LeakyReLU in f32 (VPU,
    # ample slack under the MXU slot -- intentionally not micro-optimized).
    xb = x_ref[...].astype(jnp.bfloat16)
    h = jnp.dot(xb, w1_ref[...], preferred_element_type=jnp.float32)
    h = _leaky_relu(h + b1_ref[...])

    h = jnp.dot(h.astype(jnp.bfloat16), w2_ref[...], preferred_element_type=jnp.float32)
    h = _leaky_relu(h + b2_ref[...])

    out = jnp.dot(h.astype(jnp.bfloat16), w3_ref[...], preferred_element_type=jnp.float32)
    o_ref[...] = (out + b3_ref[...]).astype(o_ref.dtype)


def _mlp_hidden_tiled_kernel(x_ref, w1_ref, b1_ref, w2_ref, b2_ref, w3_ref, b3_ref,
                             o_ref, acc_ref):
    # Grid = (batch tiles, hidden tiles). Per hidden tile j: compute the fc1 output
    # columns for that tile, apply bias+LeakyReLU, and accumulate its contribution
    # to the fc2 pre-activation (f32 accumulator scratch).  fc2 epilogue + fc3 run
    # once on the last hidden step.
    j = pl.program_id(1)

    @pl.when(j == 0)
    def _():
        acc_ref[...] = jnp.zeros_like(acc_ref)

    xb = x_ref[...].astype(jnp.bfloat16)
    h1 = jnp.dot(xb, w1_ref[...], preferred_element_type=jnp.float32)
    h1 = _leaky_relu(h1 + b1_ref[...])
    acc_ref[...] += jnp.dot(h1.astype(jnp.bfloat16), w2_ref[...],
                            preferred_element_type=jnp.float32)

    @pl.when(j == pl.num_programs(1) - 1)
    def _():
        h2 = _leaky_relu(acc_ref[...] + b2_ref[...])
        out = jnp.dot(h2.astype(jnp.bfloat16), w3_ref[...],
                      preferred_element_type=jnp.float32)
        o_ref[...] = (out + b3_ref[...]).astype(o_ref.dtype)


# --------------------------------------------------------------------------- pallas_call wrappers
@functools.partial(
    jax.jit,
    static_argnames=("num_classes", "block_b", "gen", "single_buffer_weights"))
def _mlp_forward_resident(x, w1, b1, w2, b2, w3, b3, *,
                          num_classes, block_b, gen, single_buffer_weights):
    B, in_size = x.shape
    Dp, Hp = w1.shape
    Cp = w3.shape[1]
    bb = block_b
    Bp = _round_up(B, bb)
    grid = (Bp // bb,)

    # Pad x only when actually required (dtype preserved; bf16 cast happens in-kernel).
    xp = x if x.shape == (Bp, Dp) else jnp.pad(x, ((0, Bp - B), (0, Dp - in_size)))

    def const_spec(shape):
        # Resident weights/biases: block index never changes -> single-buffer.
        if single_buffer_weights:
            return pl.BlockSpec(shape, lambda i: (0, 0), pipeline_mode=pl.Buffered(1))
        return pl.BlockSpec(shape, lambda i: (0, 0))

    # If profiling ever shows exposed x DMA in the mem-bound regime, bump the x/out
    # specs to pipeline_mode=pl.Buffered(3) (budget against the v7x 64 MiB limit).
    in_specs = [
        pl.BlockSpec((bb, Dp), lambda i: (i, 0)),   # x tile, pipelined over batch
        const_spec((Dp, Hp)), const_spec((1, Hp)),  # w1, b1
        const_spec((Hp, Hp)), const_spec((1, Hp)),  # w2, b2
        const_spec((Hp, Cp)), const_spec((1, Cp)),  # w3, b3
    ]
    out_spec = pl.BlockSpec((bb, Cp), lambda i: (i, 0))

    xi = jnp.dtype(x.dtype).itemsize
    vmem_bytes = _resident_vmem_bytes(bb, Dp, Hp, Cp, x.dtype)
    limit = max(8 << 20, min(_vmem_cap_bytes(gen), vmem_bytes))

    flops = 2 * Bp * (Dp * Hp + Hp * Hp + Hp * Cp)
    bytes_accessed = (Bp * Dp * xi
                      + (Dp * Hp + Hp * Hp + Hp * Cp) * 2
                      + (2 * Hp + Cp) * 4
                      + Bp * Cp * xi)

    out = pl.pallas_call(
        _mlp_resident_kernel,
        out_shape=jax.ShapeDtypeStruct((Bp, Cp), x.dtype),
        grid_spec=pltpu.PrefetchScalarGridSpec(
            num_scalar_prefetch=0, grid=grid, in_specs=in_specs, out_specs=out_spec),
        compiler_params=pltpu.CompilerParams(
            dimension_semantics=("parallel",), vmem_limit_bytes=limit),
        cost_estimate=pl.CostEstimate(
            flops=flops, transcendentals=0, bytes_accessed=bytes_accessed),
    )(xp, w1, b1, w2, b2, w3, b3)

    return out[:B, :num_classes]


@functools.partial(
    jax.jit,
    static_argnames=("num_classes", "block_b", "hidden_tile", "gen",
                     "single_buffer_weights"))
def _mlp_forward_hidden_tiled(x, w1, b1, w2, b2, w3, b3, *,
                              num_classes, block_b, hidden_tile, gen,
                              single_buffer_weights):
    B, in_size = x.shape
    Dp, Hp = w1.shape
    Cp = w3.shape[1]
    bb, tk = block_b, hidden_tile
    assert Hp % tk == 0 and tk % LANE == 0, (Hp, tk)
    Bp = _round_up(B, bb)
    grid = (Bp // bb, Hp // tk)

    xp = x if x.shape == (Bp, Dp) else jnp.pad(x, ((0, Bp - B), (0, Dp - in_size)))

    def const_spec(shape):
        if single_buffer_weights:
            return pl.BlockSpec(shape, lambda i, j: (0, 0), pipeline_mode=pl.Buffered(1))
        return pl.BlockSpec(shape, lambda i, j: (0, 0))

    in_specs = [
        pl.BlockSpec((bb, Dp), lambda i, j: (i, 0)),   # x (constant over j -> no re-DMA)
        pl.BlockSpec((Dp, tk), lambda i, j: (0, j)),   # w1 column tile (streamed)
        pl.BlockSpec((1, tk), lambda i, j: (0, j)),    # b1 tile
        pl.BlockSpec((tk, Hp), lambda i, j: (j, 0)),   # w2 row tile (streamed)
        const_spec((1, Hp)),                           # b2 (resident)
        const_spec((Hp, Cp)),                          # w3 (resident)
        const_spec((1, Cp)),                           # b3 (resident)
    ]
    out_spec = pl.BlockSpec((bb, Cp), lambda i, j: (i, 0))

    xi = jnp.dtype(x.dtype).itemsize
    vmem_bytes = _hidden_tiled_vmem_bytes(bb, Dp, Hp, Cp, tk, x.dtype)
    limit = max(8 << 20, min(_vmem_cap_bytes(gen), vmem_bytes))

    n_btiles = Bp // bb
    flops = 2 * Bp * (Dp * Hp + Hp * Hp + Hp * Cp)
    bytes_accessed = (Bp * Dp * xi
                      + n_btiles * (Dp * Hp + Hp * Hp) * 2   # w1/w2 re-streamed per batch tile
                      + Hp * Cp * 2 + (2 * Hp + Cp) * 4
                      + Bp * Cp * xi)

    out = pl.pallas_call(
        _mlp_hidden_tiled_kernel,
        out_shape=jax.ShapeDtypeStruct((Bp, Cp), x.dtype),
        grid_spec=pltpu.PrefetchScalarGridSpec(
            num_scalar_prefetch=0, grid=grid, in_specs=in_specs, out_specs=out_spec,
            scratch_shapes=[pltpu.VMEM((bb, Hp), jnp.float32)]),
        compiler_params=pltpu.CompilerParams(
            dimension_semantics=("parallel", "arbitrary"), vmem_limit_bytes=limit),
        cost_estimate=pl.CostEstimate(
            flops=flops, transcendentals=0, bytes_accessed=bytes_accessed),
    )(xp, w1, b1, w2, b2, w3, b3)

    return out[:B, :num_classes]


def _call_with_weight_buffering(fn, *args, **kwargs):
    try:
        return fn(*args, single_buffer_weights=True, **kwargs)
    except _BUFFERED1_ERRORS:
        # Narrow fallback: only if this build rejects pl.Buffered(1) single-buffering.
        return fn(*args, single_buffer_weights=False, **kwargs)


# --------------------------------------------------------------------------- public API
class PreparedMLP(NamedTuple):
    w1: jax.Array  # (Dp, Hp) bf16
    b1: jax.Array  # (1, Hp)  f32
    w2: jax.Array  # (Hp, Hp) bf16
    b2: jax.Array  # (1, Hp)  f32
    w3: jax.Array  # (Hp, Cp) bf16
    b3: jax.Array  # (1, Cp)  f32
    dims: tuple    # (input_size, hidden_size, num_classes) -- original dims
    gen: int       # TPU generation used to pick padding granularity


def prepare_params(w1, b1, w2, b2, w3, b3, *, gen=None):
    """One-time weight preparation: pad to TPU-friendly shapes + cast to bf16.

    Call once and reuse across forwards -- this hoists the weight pad/cast HBM
    traffic out of the per-call path.
    """
    # TODO(synk): optional opt-in fp8 weight path (per-channel scales) for the v7x MXU.
    gen = _tpu_generation() if gen is None else gen
    in_size, hidden = w1.shape
    num_classes = w3.shape[1]
    Dp, Hp, Cp = _pad_dim(in_size, gen), _pad_dim(hidden, gen), _pad_dim(num_classes, gen)
    return PreparedMLP(
        w1=_pad_to(w1, (Dp, Hp), jnp.bfloat16),
        b1=_pad_to(jnp.reshape(b1, (1, -1)), (1, Hp), jnp.float32),
        w2=_pad_to(w2, (Hp, Hp), jnp.bfloat16),
        b2=_pad_to(jnp.reshape(b2, (1, -1)), (1, Hp), jnp.float32),
        w3=_pad_to(w3, (Hp, Cp), jnp.bfloat16),
        b3=_pad_to(jnp.reshape(b3, (1, -1)), (1, Cp), jnp.float32),
        dims=(in_size, hidden, num_classes),
        gen=gen,
    )


def mlp_forward(x, params: PreparedMLP, *, block_b=None, force_hidden_tiling=False,
                hidden_tile=None):
    """Fused MLP forward.  x: (..., input_size); params from prepare_params()."""
    in_size, _, num_classes = params.dims
    gen = params.gen
    Dp, Hp = params.w1.shape
    Cp = params.w3.shape[1]

    assert x.shape[-1] == in_size, (x.shape, in_size)
    lead = x.shape[:-1]
    x2d = x.reshape(-1, in_size) if x.ndim != 2 else x
    B = x2d.shape[0]

    bb = block_b if block_b is not None else _default_block_b(B, gen)
    bb = max(8, min(bb, _round_up(B, 8)))

    phys_vmem = (64 if gen >= 7 else 128) << 20
    use_hidden_tiling = force_hidden_tiling or (
        _resident_weight_bytes(Dp, Hp, Cp) > 0.45 * phys_vmem)

    weights = (params.w1, params.b1, params.w2, params.b2, params.w3, params.b3)

    if use_hidden_tiling:
        tk = hidden_tile if hidden_tile is not None else _default_hidden_tile(
            Hp, Dp, _vmem_cap_bytes(gen))
        out = _call_with_weight_buffering(
            _mlp_forward_hidden_tiled, x2d, *weights,
            num_classes=num_classes, block_b=bb, hidden_tile=tk, gen=gen)
    else:
        if block_b is None:
            # Shrink the batch tile only if the resident footprint would exceed budget.
            while bb > 64 and _resident_vmem_bytes(bb, Dp, Hp, Cp, x2d.dtype) > _vmem_cap_bytes(gen):
                bb = max(64, _round_up(bb // 2, 8))
        out = _call_with_weight_buffering(
            _mlp_forward_resident, x2d, *weights,
            num_classes=num_classes, block_b=bb, gen=gen)

    if x.ndim != 2:
        out = out.reshape(*lead, num_classes)
    return out


# --------------------------------------------------------------------------- params / references
def init_params(key, input_size, hidden_size, num_classes, dtype=jnp.float32):
    """Deterministic synthetic params (PyTorch-Linear-like uniform init).
    Weights are (in_features, out_features); biases are (1, out_features)."""
    def linear(k, fan_in, fan_out):
        k_w, k_b = jax.random.split(k)
        bound = 1.0 / jnp.sqrt(fan_in)
        w = jax.random.uniform(k_w, (fan_in, fan_out), dtype, -bound, bound)
        b = jax.random.uniform(k_b, (1, fan_out), dtype, -bound, bound)
        return w, b

    k1, k2, k3 = jax.random.split(key, 3)
    w1, b1 = linear(k1, input_size, hidden_size)
    w2, b2 = linear(k2, hidden_size, hidden_size)
    w3, b3 = linear(k3, hidden_size, num_classes)
    return w1, b1, w2, b2, w3, b3


def mlp_reference(x, w1, b1, w2, b2, w3, b3):
    """Reference matching the kernel numerics (bf16 operands, f32 accumulation)."""
    bf = jnp.bfloat16
    h = jnp.dot(x.astype(bf), w1.astype(bf), preferred_element_type=jnp.float32) + b1
    h = jnp.where(h > 0, h, NEG_SLOPE * h)
    h = jnp.dot(h.astype(bf), w2.astype(bf), preferred_element_type=jnp.float32) + b2
    h = jnp.where(h > 0, h, NEG_SLOPE * h)
    return jnp.dot(h.astype(bf), w3.astype(bf), preferred_element_type=jnp.float32) + b3


def mlp_reference_f32(x, w1, b1, w2, b2, w3, b3):
    h = jnp.dot(x, w1) + b1
    h = jnp.where(h > 0, h, NEG_SLOPE * h)
    h = jnp.dot(h, w2) + b2
    h = jnp.where(h > 0, h, NEG_SLOPE * h)
    return jnp.dot(h, w3) + b3


# --------------------------------------------------------------------------- demo / check
if __name__ == "__main__":
    # Test 1: resident-weight fast path.
    input_size, hidden_size, num_classes = 32, 64, 16
    batch = 64

    key = jax.random.PRNGKey(0)
    k_x, k_p = jax.random.split(key)
    x = jax.random.normal(k_x, (batch, input_size), dtype=jnp.float32)
    raw = init_params(k_p, input_size, hidden_size, num_classes)

    prep = prepare_params(*raw)           # one-time pad + bf16 cast (hoisted)
    out = jax.block_until_ready(mlp_forward(x, prep))

    ref = mlp_reference(x, *raw)
    ref_f32 = mlp_reference_f32(x, *raw)
    assert out.shape == (batch, num_classes), out.shape
    assert jnp.allclose(out, ref, atol=2e-2, rtol=2e-2), float(jnp.max(jnp.abs(out - ref)))
    assert jnp.allclose(out, ref_f32, atol=1e-1, rtol=1e-1), float(
        jnp.max(jnp.abs(out - ref_f32)))

    # Test 2: hidden-dim-tiled path (the large-weight / v7x-64MiB route), forced at a
    # small size so the accumulator-scratch kernel is exercised and checked too.
    in2, hid2, cls2 = 96, 320, 24
    x2 = jax.random.normal(jax.random.PRNGKey(1), (40, in2), dtype=jnp.float32)
    raw2 = init_params(jax.random.PRNGKey(2), in2, hid2, cls2)
    prep2 = prepare_params(*raw2)
    out2 = jax.block_until_ready(
        mlp_forward(x2, prep2, force_hidden_tiling=True, hidden_tile=128))
    ref2 = mlp_reference(x2, *raw2)
    assert out2.shape == (40, cls2), out2.shape
    assert jnp.allclose(out2, ref2, atol=2e-2, rtol=2e-2), float(
        jnp.max(jnp.abs(out2 - ref2)))

    print("KERNEL_OK")
</pallas_src>

<mosaic_0001>
module attributes {stable_mosaic.version = 11 : i64} {
  func.func @_mlp_resident_kernel(%arg0: i32, %arg1: memref<64x128xf32, #tpu.memory_space<vmem>>, %arg2: memref<128x128xbf16, #tpu.memory_space<vmem>>, %arg3: memref<1x128xf32, #tpu.memory_space<vmem>>, %arg4: memref<128x128xbf16, #tpu.memory_space<vmem>>, %arg5: memref<1x128xf32, #tpu.memory_space<vmem>>, %arg6: memref<128x128xbf16, #tpu.memory_space<vmem>>, %arg7: memref<1x128xf32, #tpu.memory_space<vmem>>, %arg8: memref<64x128xf32, #tpu.memory_space<vmem>>) attributes {dimension_semantics = [#tpu.dimension_semantics<parallel>], iteration_bounds = array<i64: 1>, scalar_prefetch = 0 : i64, scratch_operands = 0 : i64, tpu.core_type = #tpu.core_type<tc>, window_params = [{transform_indices = @transform_0, window_bounds = array<i64: 64, 128>}, {pipeline_mode = #tpu.pipeline_mode<synchronous>, transform_indices = @transform_1, window_bounds = array<i64: 128, 128>}, {pipeline_mode = #tpu.pipeline_mode<synchronous>, transform_indices = @transform_2, window_bounds = array<i64: 1, 128>}, {pipeline_mode = #tpu.pipeline_mode<synchronous>, transform_indices = @transform_3, window_bounds = array<i64: 128, 128>}, {pipeline_mode = #tpu.pipeline_mode<synchronous>, transform_indices = @transform_4, window_bounds = array<i64: 1, 128>}, {pipeline_mode = #tpu.pipeline_mode<synchronous>, transform_indices = @transform_5, window_bounds = array<i64: 128, 128>}, {pipeline_mode = #tpu.pipeline_mode<synchronous>, transform_indices = @transform_6, window_bounds = array<i64: 1, 128>}, {transform_indices = @transform_7, window_bounds = array<i64: 64, 128>}]} {
    %c0 = arith.constant 0 : index
    %c0_0 = arith.constant 0 : index
    %0 = vector.load %arg1[%c0, %c0_0] : memref<64x128xf32, #tpu.memory_space<vmem>>, vector<64x128xf32>
    %1 = arith.truncf %0 : vector<64x128xf32> to vector<64x128xbf16>
    %c0_1 = arith.constant 0 : index
    %c0_2 = arith.constant 0 : index
    %2 = vector.load %arg2[%c0_1, %c0_2] : memref<128x128xbf16, #tpu.memory_space<vmem>>, vector<128x128xbf16>
    %cst = arith.constant dense<0.000000e+00> : vector<64x128xf32>
    %3 = tpu.matmul %1, %2, %cst {dimension_numbers = #tpu.dot_dimension_numbers<[1], [0], [0], [1], [0, 0, 1, 1], [], []>} : vector<64x128xbf16>, vector<128x128xbf16>, vector<64x128xf32> -> vector<64x128xf32>
    %c0_3 = arith.constant 0 : index
    %c0_4 = arith.constant 0 : index
    %4 = vector.load %arg3[%c0_3, %c0_4] : memref<1x128xf32, #tpu.memory_space<vmem>>, vector<1x128xf32>
    %5 = vector.broadcast %4 : vector<1x128xf32> to vector<64x128xf32>
    %6 = arith.addf %3, %5 : vector<64x128xf32>
    %cst_5 = arith.constant 0.000000e+00 : f32
    %7 = vector.broadcast %cst_5 : f32 to vector<64x128xf32>
    %8 = arith.cmpf ogt, %6, %7 : vector<64x128xf32>
    %cst_6 = arith.constant 0.00999999977 : f32
    %9 = vector.broadcast %cst_6 : f32 to vector<64x128xf32>
    %10 = arith.mulf %9, %6 : vector<64x128xf32>
    %11 = arith.select %8, %6, %10 : vector<64x128xi1>, vector<64x128xf32>
    %12 = arith.truncf %11 : vector<64x128xf32> to vector<64x128xbf16>
    %c0_7 = arith.constant 0 : index
    %c0_8 = arith.constant 0 : index
    %13 = vector.load %arg4[%c0_7, %c0_8] : memref<128x128xbf16, #tpu.memory_space<vmem>>, vector<128x128xbf16>
    %cst_9 = arith.constant dense<0.000000e+00> : vector<64x128xf32>
    %14 = tpu.matmul %12, %13, %cst_9 {dimension_numbers = #tpu.dot_dimension_numbers<[1], [0], [0], [1], [0, 0, 1, 1], [], []>} : vector<64x128xbf16>, vector<128x128xbf16>, vector<64x128xf32> -> vector<64x128xf32>
    %c0_10 = arith.constant 0 : index
    %c0_11 = arith.constant 0 : index
    %15 = vector.load %arg5[%c0_10, %c0_11] : memref<1x128xf32, #tpu.memory_space<vmem>>, vector<1x128xf32>
    %16 = vector.broadcast %15 : vector<1x128xf32> to vector<64x128xf32>
    %17 = arith.addf %14, %16 : vector<64x128xf32>
    %cst_12 = arith.constant 0.000000e+00 : f32
    %18 = vector.broadcast %cst_12 : f32 to vector<64x128xf32>
    %19 = arith.cmpf ogt, %17, %18 : vector<64x128xf32>
    %cst_13 = arith.constant 0.00999999977 : f32
    %20 = vector.broadcast %cst_13 : f32 to vector<64x128xf32>
    %21 = arith.mulf %20, %17 : vector<64x128xf32>
    %22 = arith.select %19, %17, %21 : vector<64x128xi1>, vector<64x128xf32>
    %23 = arith.truncf %22 : vector<64x128xf32> to vector<64x128xbf16>
    %c0_14 = arith.constant 0 : index
    %c0_15 = arith.constant 0 : index
    %24 = vector.load %arg6[%c0_14, %c0_15] : memref<128x128xbf16, #tpu.memory_space<vmem>>, vector<128x128xbf16>
    %cst_16 = arith.constant dense<0.000000e+00> : vector<64x128xf32>
    %25 = tpu.matmul %23, %24, %cst_16 {dimension_numbers = #tpu.dot_dimension_numbers<[1], [0], [0], [1], [0, 0, 1, 1], [], []>} : vector<64x128xbf16>, vector<128x128xbf16>, vector<64x128xf32> -> vector<64x128xf32>
    %c0_17 = arith.constant 0 : index
    %c0_18 = arith.constant 0 : index
    %26 = vector.load %arg7[%c0_17, %c0_18] : memref<1x128xf32, #tpu.memory_space<vmem>>, vector<1x128xf32>
    %27 = vector.broadcast %26 : vector<1x128xf32> to vector<64x128xf32>
    %28 = arith.addf %25, %27 : vector<64x128xf32>
    %c0_19 = arith.constant 0 : index
    %c0_20 = arith.constant 0 : index
    %29 = vector.load %arg8[%c0_19, %c0_20] : memref<64x128xf32, #tpu.memory_space<vmem>>, vector<64x128xf32>
    tpu.vector_store %arg8[%c0_19, %c0_20], %28 {strides = array<i32>} : memref<64x128xf32, #tpu.memory_space<vmem>>, vector<64x128xf32>,
    return
  }
  func.func @transform_0(%arg0: i32) -> (i32, i32) {
    %c0_i32 = arith.constant 0 : i32
    %c0_i32_0 = arith.constant 0 : i32
    return %arg0, %c0_i32 : i32, i32
  }
  func.func @transform_1(%arg0: i32) -> (i32, i32) {
    %c0_i32 = arith.constant 0 : i32
    %c0_i32_0 = arith.constant 0 : i32
    %c0_i32_1 = arith.constant 0 : i32
    return %c0_i32, %c0_i32_0 : i32, i32
  }
  func.func @transform_2(%arg0: i32) -> (i32, i32) {
    %c0_i32 = arith.constant 0 : i32
    %c0_i32_0 = arith.constant 0 : i32
    %c0_i32_1 = arith.constant 0 : i32
    return %c0_i32, %c0_i32_0 : i32, i32
  }
  func.func @transform_3(%arg0: i32) -> (i32, i32) {
    %c0_i32 = arith.constant 0 : i32
    %c0_i32_0 = arith.constant 0 : i32
    %c0_i32_1 = arith.constant 0 : i32
    return %c0_i32, %c0_i32_0 : i32, i32
  }
  func.func @transform_4(%arg0: i32) -> (i32, i32) {
    %c0_i32 = arith.constant 0 : i32
    %c0_i32_0 = arith.constant 0 : i32
    %c0_i32_1 = arith.constant 0 : i32
    return %c0_i32, %c0_i32_0 : i32, i32
  }
  func.func @transform_5(%arg0: i32) -> (i32, i32) {
    %c0_i32 = arith.constant 0 : i32
    %c0_i32_0 = arith.constant 0 : i32
    %c0_i32_1 = arith.constant 0 : i32
    return %c0_i32, %c0_i32_0 : i32, i32
  }
  func.func @transform_6(%arg0: i32) -> (i32, i32) {
    %c0_i32 = arith.constant 0 : i32
    %c0_i32_0 = arith.constant 0 : i32
    %c0_i32_1 = arith.constant 0 : i32
    return %c0_i32, %c0_i32_0 : i32, i32
  }
  func.func @transform_7(%arg0: i32) -> (i32, i32) {
    %c0_i32 = arith.constant 0 : i32
    %c0_i32_0 = arith.constant 0 : i32
    return %arg0, %c0_i32 : i32, i32
  }
}

</mosaic_0001>

<llo_original>
// kernel: _mlp_forward_resident.1
$region0: #{_mlp_forward_resident.1}
  #allocation0 [shape = 'u32[]', space=smem, size = 0x4, offset = 0x4, fixed_abs, tag = 'smem constant byte address 0x4 - core index']
  #allocation1 [shape = 'u32[144,128]{1,0:T(1,128)}', space=vmem, size = 0x12000, scoped, tag = 'internal scratch']
  %s0 = inlined_call_operand.vmem [shape: f32[64,128], index: 0, kind: input, shape index: {}]
  %s1 = inlined_call_operand.vmem [shape: bf16[128,128], index: 1, kind: input, shape index: {}]
  %s2 = inlined_call_operand.vmem [shape: f32[1,128], index: 2, kind: input, shape index: {}]
  %s3 = inlined_call_operand.vmem [shape: bf16[128,128], index: 3, kind: input, shape index: {}]
  %s4 = inlined_call_operand.vmem [shape: f32[1,128], index: 4, kind: input, shape index: {}]
  %s5 = inlined_call_operand.vmem [shape: bf16[128,128], index: 5, kind: input, shape index: {}]
  %s6 = inlined_call_operand.vmem [shape: f32[1,128], index: 6, kind: input, shape index: {}]
  %s7 = inlined_call_operand.vmem [shape: f32[64,128], index: 7, kind: output, shape index: {}]
  %s8 = sld [smem:[#allocation0]]
  $region38: #{_mlp_forward_resident.1} parent=0
    _
  %s10 = ssub.s32 1, %s8
  %s11 = scalar_select 0, %s10, %s8
  // Predicated region
  $region2: #{_mlp_forward_resident.1} parent=0 // pred_check
    _
  $region3: #{_mlp_forward_resident.1} parent=0 // pred_check_branch
    %13 = sbr.rel (0) target = $region5
  $region4: #{_mlp_forward_resident.1} parent=0 // pred_region
    _
  $region5: #{_mlp_forward_resident.1} parent=0 // pred_fallthru
    _
  // Predicated region
  $region6: #{_mlp_forward_resident.1} parent=0 // pred_check
    _
  $region7: #{_mlp_forward_resident.1} parent=0 // pred_check_branch
    %15 = sbr.rel (0) target = $region9
  $region8: #{_mlp_forward_resident.1} parent=0 // pred_region
    _
  $region9: #{_mlp_forward_resident.1} parent=0 // pred_fallthru
    _
  // Predicated region
  $region10: #{_mlp_forward_resident.1} parent=0 // pred_check
    _
  $region11: #{_mlp_forward_resident.1} parent=0 // pred_check_branch
    %17 = sbr.rel (0) target = $region13
  $region12: #{_mlp_forward_resident.1} parent=0 // pred_region
    _
  $region13: #{_mlp_forward_resident.1} parent=0 // pred_fallthru
    _
  // Predicated region
  $region14: #{_mlp_forward_resident.1} parent=0 // pred_check
    _
  $region15: #{_mlp_forward_resident.1} parent=0 // pred_check_branch
    %19 = sbr.rel (0) target = $region17
  $region16: #{_mlp_forward_resident.1} parent=0 // pred_region
    _
  $region17: #{_mlp_forward_resident.1} parent=0 // pred_fallthru
    _
  // Predicated region
  $region18: #{_mlp_forward_resident.1} parent=0 // pred_check
    _
  $region19: #{_mlp_forward_resident.1} parent=0 // pred_check_branch
    %21 = sbr.rel (0) target = $region21
  $region20: #{_mlp_forward_resident.1} parent=0 // pred_region
    _
  $region21: #{_mlp_forward_resident.1} parent=0 // pred_fallthru
    _
  // Predicated region
  $region22: #{_mlp_forward_resident.1} parent=0 // pred_check
    _
  $region23: #{_mlp_forward_resident.1} parent=0 // pred_check_branch
    %23 = sbr.rel (0) target = $region25
  $region24: #{_mlp_forward_resident.1} parent=0 // pred_region
    _
  $region25: #{_mlp_forward_resident.1} parent=0 // pred_fallthru
    _
  // Predicated region
  $region26: #{_mlp_forward_resident.1} parent=0 // pred_check
    _
  $region27: #{_mlp_forward_resident.1} parent=0 // pred_check_branch
    %25 = sbr.rel (0) target = $region29
  $region28: #{_mlp_forward_resident.1} parent=0 // pred_region
    _
  $region29: #{_mlp_forward_resident.1} parent=0 // pred_fallthru
    _
  %v27 = vld [vmem:[%s0] sm:$0xff]
  %v28 = vld [vmem:[%s0 + $0x8] sm:$0xff]
  %v29 = vld [vmem:[%s0 + $0x10] sm:$0xff]
  %v30 = vld [vmem:[%s0 + $0x18] sm:$0xff]
  %v31 = vld [vmem:[%s0 + $0x20] sm:$0xff]
  %v32 = vld [vmem:[%s0 + $0x28] sm:$0xff]
  %v33 = vld [vmem:[%s0 + $0x30] sm:$0xff]
  %v34 = vld [vmem:[%s0 + $0x38] sm:$0xff]
  %v35 = vpack.c.bf16 %v28, %v27
  %v36 = vpack.c.bf16 %v30, %v29
  %v37 = vpack.c.bf16 %v32, %v31
  %v38 = vpack.c.bf16 %v34, %v33
  %v39 = vld [vmem:[%s1] sm:$0xf]
  %v40 = vld [vmem:[%s1 + $0x4] sm:$0xf]
  %v41 = vld [vmem:[%s1 + $0x8] sm:$0xf]
  %v42 = vld [vmem:[%s1 + $0xc] sm:$0xf]
  %v43 = vld [vmem:[%s1 + $0x10] sm:$0xf]
  %v44 = vld [vmem:[%s1 + $0x14] sm:$0xf]
  %v45 = vld [vmem:[%s1 + $0x18] sm:$0xf]
  %v46 = vld [vmem:[%s1 + $0x1c] sm:$0xf]
  %v47 = vld [vmem:[%s1 + $0x20] sm:$0xf]
  %v48 = vld [vmem:[%s1 + $0x24] sm:$0xf]
  %v49 = vld [vmem:[%s1 + $0x28] sm:$0xf]
  %v50 = vld [vmem:[%s1 + $0x2c] sm:$0xf]
  %v51 = vld [vmem:[%s1 + $0x30] sm:$0xf]
  %v52 = vld [vmem:[%s1 + $0x34] sm:$0xf]
  %v53 = vld [vmem:[%s1 + $0x38] sm:$0xf]
  %v54 = vld [vmem:[%s1 + $0x3c] sm:$0xf]
  %v55 = vld [vmem:[%s2] sm:$0x1]
  %v57 = vlaneseq
  %v58 = vshrl.u32 %v57, 7
  %v59 = vsub.s32 0, %v58
  %v60 = vrot.slane %v55, %v59
  %v78 = vunpack.c.l.b16 %v39
  %v79 = vunpack.c.l.b16 %v40
  %v80 = vunpack.c.l.b16 %v41
  %v81 = vunpack.c.l.b16 %v42
  %v82 = vunpack.c.l.b16 %v43
  %v83 = vunpack.c.l.b16 %v44
  %v84 = vunpack.c.l.b16 %v45
  %v85 = vunpack.c.l.b16 %v46
  %v86 = vunpack.c.l.b16 %v47
  %v87 = vunpack.c.l.b16 %v48
  %v88 = vunpack.c.l.b16 %v49
  %v89 = vunpack.c.l.b16 %v50
  %v90 = vunpack.c.l.b16 %v51
  %v91 = vunpack.c.l.b16 %v52
  %v92 = vunpack.c.l.b16 %v53
  %v93 = vunpack.c.l.b16 %v54
  %v94 = vpack.c.b16 %v79, %v78
  %v95 = vpack.c.b16 %v81, %v80
  %v96 = vpack.c.b16 %v83, %v82
  %v97 = vpack.c.b16 %v85, %v84
  %v98 = vpack.c.b16 %v87, %v86
  %v99 = vpack.c.b16 %v89, %v88
  %v100 = vpack.c.b16 %v91, %v90
  %v101 = vpack.c.b16 %v93, %v92
  %110 = vmatprep.subr.bf16.mxu0 0
  %111 = vmatpush1.bf16.msra.mxu0 %v94
  %112 = vmatprep.subr.bf16.mxu0 0
  %113 = vmatpush1.bf16.msra.mxu0 %v95
  %114 = vmatprep.subr.bf16.mxu0 0
  %115 = vmatpush1.bf16.msra.mxu0 %v96
  %116 = vmatprep.subr.bf16.mxu0 0
  %117 = vmatpush1.bf16.msra.mxu0 %v97
  %118 = vmatprep.subr.bf16.mxu0 0
  %119 = vmatpush1.bf16.msra.mxu0 %v98
  %120 = vmatprep.subr.bf16.mxu0 0
  %121 = vmatpush1.bf16.msra.mxu0 %v99
  %122 = vmatprep.subr.bf16.mxu0 0
  %123 = vmatpush1.bf16.msra.mxu0 %v100
  %124 = vmatprep.subr.bf16.mxu0 0
  %125 = vmatpush1.bf16.msra.mxu0 %v101
  %126 = vmatprep.subr.bf16.mxu0 0
  %127 = vmatpush1.bf16.msra.mxu0 0
  %128 = vmatprep.subr.bf16.mxu0 0
  %129 = vmatpush1.bf16.msra.mxu0 0
  %130 = vmatprep.subr.bf16.mxu0 0
  %131 = vmatpush1.bf16.msra.mxu0 0
  %132 = vmatprep.subr.bf16.mxu0 0
  %133 = vmatpush1.bf16.msra.mxu0 0
  %134 = vmatprep.subr.bf16.mxu0 0
  %135 = vmatpush1.bf16.msra.mxu0 0
  %136 = vmatprep.subr.bf16.mxu0 0
  %137 = vmatpush1.bf16.msra.mxu0 0
  %138 = vmatprep.subr.bf16.mxu0 0
  %139 = vmatpush1.bf16.msra.mxu0 0
  %140 = vmatprep.subr.bf16.mxu0 0
  %141 = vmatpush1.bf16.msra.mxu0 0
  %142 = vmatprep.mubr.bf16.mxu0 0
  %143 = vmatmul.mubr.bf16.gmra.mrb[0].mxu0 %v35
  %v144 = vpop.f32.mrb[0].mxu0
  %v145 = vadd.f32 %v60, %v144
  %v146 = vpop.f32.mrb[0].mxu0
  %v147 = vpop.f32.mrb[0].mxu0
  %v148 = vadd.f32 %v60, %v147
  %v149 = vpop.f32.mrb[0].mxu0
  %150 = vmatprep.mubr.bf16.mxu0 0
  %151 = vmatmul.mubr.bf16.gmra.mrb[0].mxu0 %v36
  %v152 = vpop.f32.mrb[0].mxu0
  %v153 = vadd.f32 %v60, %v152
  %v154 = vpop.f32.mrb[0].mxu0
  %v155 = vpop.f32.mrb[0].mxu0
  %v156 = vadd.f32 %v60, %v155
  %v157 = vpop.f32.mrb[0].mxu0
  %158 = vmatprep.mubr.bf16.mxu0 0
  %159 = vmatmul.mubr.bf16.gmra.mrb[0].mxu0 %v37
  %v160 = vpop.f32.mrb[0].mxu0
  %v161 = vadd.f32 %v60, %v160
  %v162 = vpop.f32.mrb[0].mxu0
  %v163 = vpop.f32.mrb[0].mxu0
  %v164 = vadd.f32 %v60, %v163
  %v165 = vpop.f32.mrb[0].mxu0
  %166 = vmatprep.mubr.bf16.mxu0 0
  %167 = vmatmul.mubr.bf16.gmra.mrb[0].mxu0 %v38
  %v168 = vpop.f32.mrb[0].mxu0
  %v169 = vadd.f32 %v60, %v168
  %v170 = vpop.f32.mrb[0].mxu0
  %v171 = vpop.f32.mrb[0].mxu0
  %v172 = vadd.f32 %v60, %v171
  %v173 = vpop.f32.mrb[0].mxu0
  %174 = vdwg.mxu0
  %vm175 = vcmp.gt.f32.partialorder %v145, 0.0
  %vm176 = vcmp.gt.f32.partialorder %v148, 0.0
  %vm177 = vcmp.gt.f32.partialorder %v153, 0.0
  %vm178 = vcmp.gt.f32.partialorder %v156, 0.0
  %vm179 = vcmp.gt.f32.partialorder %v161, 0.0
  %vm180 = vcmp.gt.f32.partialorder %v164, 0.0
  %vm181 = vcmp.gt.f32.partialorder %v169, 0.0
  %vm182 = vcmp.gt.f32.partialorder %v172, 0.0
  %v183 = vmul.f32 %v145, 0.01
  %v184 = vmul.f32 %v148, 0.01
  %v185 = vmul.f32 %v153, 0.01
  %v186 = vmul.f32 %v156, 0.01
  %v187 = vmul.f32 %v161, 0.01
  %v188 = vmul.f32 %v164, 0.01
  %v189 = vmul.f32 %v169, 0.01
  %v190 = vmul.f32 %v172, 0.01
  %v191 = vsel %vm175, %v145, %v183
  %v192 = vsel %vm176, %v148, %v184
  %v193 = vsel %vm177, %v153, %v185
  %v194 = vsel %vm178, %v156, %v186
  %v195 = vsel %vm179, %v161, %v187
  %v196 = vsel %vm180, %v164, %v188
  %v197 = vsel %vm181, %v169, %v189
  %v198 = vsel %vm182, %v172, %v190
  %v199 = vpack.c.bf16 %v192, %v191
  %v200 = vpack.c.bf16 %v194, %v193
  %v201 = vpack.c.bf16 %v196, %v195
  %v202 = vpack.c.bf16 %v198, %v197
  %v203 = vld [vmem:[%s3] sm:$0xf]
  %v204 = vld [vmem:[%s3 + $0x4] sm:$0xf]
  %v205 = vld [vmem:[%s3 + $0x8] sm:$0xf]
  %v206 = vld [vmem:[%s3 + $0xc] sm:$0xf]
  %v207 = vld [vmem:[%s3 + $0x10] sm:$0xf]
  %v208 = vld [vmem:[%s3 + $0x14] sm:$0xf]
  %v209 = vld [vmem:[%s3 + $0x18] sm:$0xf]
  %v210 = vld [vmem:[%s3 + $0x1c] sm:$0xf]
  %v211 = vld [vmem:[%s3 + $0x20] sm:$0xf]
  %v212 = vld [vmem:[%s3 + $0x24] sm:$0xf]
  %v213 = vld [vmem:[%s3 + $0x28] sm:$0xf]
  %v214 = vld [vmem:[%s3 + $0x2c] sm:$0xf]
  %v215 = vld [vmem:[%s3 + $0x30] sm:$0xf]
  %v216 = vld [vmem:[%s3 + $0x34] sm:$0xf]
  %v217 = vld [vmem:[%s3 + $0x38] sm:$0xf]
  %v218 = vld [vmem:[%s3 + $0x3c] sm:$0xf]
  %v219 = vld [vmem:[%s4] sm:$0x1]
  %v221 = vlaneseq
  %v222 = vshrl.u32 %v221, 7
  %v223 = vsub.s32 0, %v222
  %v224 = vrot.slane %v219, %v223
  %v242 = vunpack.c.l.b16 %v203
  %v243 = vunpack.c.l.b16 %v204
  %v244 = vunpack.c.l.b16 %v205
  %v245 = vunpack.c.l.b16 %v206
  %v246 = vunpack.c.l.b16 %v207
  %v247 = vunpack.c.l.b16 %v208
  %v248 = vunpack.c.l.b16 %v209
  %v249 = vunpack.c.l.b16 %v210
  %v250 = vunpack.c.l.b16 %v211
  %v251 = vunpack.c.l.b16 %v212
  %v252 = vunpack.c.l.b16 %v213
  %v253 = vunpack.c.l.b16 %v214
  %v254 = vunpack.c.l.b16 %v215
  %v255 = vunpack.c.l.b16 %v216
  %v256 = vunpack.c.l.b16 %v217
  %v257 = vunpack.c.l.b16 %v218
  %v258 = vpack.c.b16 %v243, %v242
  %v259 = vpack.c.b16 %v245, %v244
  %v260 = vpack.c.b16 %v247, %v246
  %v261 = vpack.c.b16 %v249, %v248
  %v262 = vpack.c.b16 %v251, %v250
  %v263 = vpack.c.b16 %v253, %v252
  %v264 = vpack.c.b16 %v255, %v254
  %v265 = vpack.c.b16 %v257, %v256
  %274 = vmatprep.subr.bf16.mxu0 0
  %275 = vmatpush1.bf16.msra.mxu0 %v258
  %276 = vmatprep.subr.bf16.mxu0 0
  %277 = vmatpush1.bf16.msra.mxu0 %v259
  %278 = vmatprep.subr.bf16.mxu0 0
  %279 = vmatpush1.bf16.msra.mxu0 %v260
  %280 = vmatprep.subr.bf16.mxu0 0
  %281 = vmatpush1.bf16.msra.mxu0 %v261
  %282 = vmatprep.subr.bf16.mxu0 0
  %283 = vmatpush1.bf16.msra.mxu0 %v262
  %284 = vmatprep.subr.bf16.mxu0 0
  %285 = vmatpush1.bf16.msra.mxu0 %v263
  %286 = vmatprep.subr.bf16.mxu0 0
  %287 = vmatpush1.bf16.msra.mxu0 %v264
  %288 = vmatprep.subr.bf16.mxu0 0
  %289 = vmatpush1.bf16.msra.mxu0 %v265
  %290 = vmatprep.subr.bf16.mxu0 0
  %291 = vmatpush1.bf16.msra.mxu0 0
  %292 = vmatprep.subr.bf16.mxu0 0
  %293 = vmatpush1.bf16.msra.mxu0 0
  %294 = vmatprep.subr.bf16.mxu0 0
  %295 = vmatpush1.bf16.msra.mxu0 0
  %296 = vmatprep.subr.bf16.mxu0 0
  %297 = vmatpush1.bf16.msra.mxu0 0
  %298 = vmatprep.subr.bf16.mxu0 0
  %299 = vmatpush1.bf16.msra.mxu0 0
  %300 = vmatprep.subr.bf16.mxu0 0
  %301 = vmatpush1.bf16.msra.mxu0 0
  %302 = vmatprep.subr.bf16.mxu0 0
  %303 = vmatpush1.bf16.msra.mxu0 0
  %304 = vmatprep.subr.bf16.mxu0 0
  %305 = vmatpush1.bf16.msra.mxu0 0
  %306 = vmatprep.mubr.bf16.mxu0 0
  %307 = vmatmul.mubr.bf16.gmra.mrb[0].mxu0 %v199
  %v308 = vpop.f32.mrb[0].mxu0
  %v309 = vadd.f32 %v224, %v308
  %v310 = vpop.f32.mrb[0].mxu0
  %v311 = vpop.f32.mrb[0].mxu0
  %v312 = vadd.f32 %v224, %v311
  %v313 = vpop.f32.mrb[0].mxu0
  %314 = vmatprep.mubr.bf16.mxu0 0
  %315 = vmatmul.mubr.bf16.gmra.mrb[0].mxu0 %v200
  %v316 = vpop.f32.mrb[0].mxu0
  %v317 = vadd.f32 %v224, %v316
  %v318 = vpop.f32.mrb[0].mxu0
  %v319 = vpop.f32.mrb[0].mxu0
  %v320 = vadd.f32 %v224, %v319
  %v321 = vpop.f32.mrb[0].mxu0
  %322 = vmatprep.mubr.bf16.mxu0 0
  %323 = vmatmul.mubr.bf16.gmra.mrb[0].mxu0 %v201
  %v324 = vpop.f32.mrb[0].mxu0
  %v325 = vadd.f32 %v224, %v324
  %v326 = vpop.f32.mrb[0].mxu0
  %v327 = vpop.f32.mrb[0].mxu0
  %v328 = vadd.f32 %v224, %v327
  %v329 = vpop.f32.mrb[0].mxu0
  %330 = vmatprep.mubr.bf16.mxu0 0
  %331 = vmatmul.mubr.bf16.gmra.mrb[0].mxu0 %v202
  %v332 = vpop.f32.mrb[0].mxu0
  %v333 = vadd.f32 %v224, %v332
  %v334 = vpop.f32.mrb[0].mxu0
  %v335 = vpop.f32.mrb[0].mxu0
  %v336 = vadd.f32 %v224, %v335
  %v337 = vpop.f32.mrb[0].mxu0
  %338 = vdwg.mxu0
  %vm339 = vcmp.gt.f32.partialorder %v309, 0.0
  %vm340 = vcmp.gt.f32.partialorder %v312, 0.0
  %vm341 = vcmp.gt.f32.partialorder %v317, 0.0
  %vm342 = vcmp.gt.f32.partialorder %v320, 0.0
  %vm343 = vcmp.gt.f32.partialorder %v325, 0.0
  %vm344 = vcmp.gt.f32.partialorder %v328, 0.0
  %vm345 = vcmp.gt.f32.partialorder %v333, 0.0
  %vm346 = vcmp.gt.f32.partialorder %v336, 0.0
  %v347 = vmul.f32 %v309, 0.01
  %v348 = vmul.f32 %v312, 0.01
  %v349 = vmul.f32 %v317, 0.01
  %v350 = vmul.f32 %v320, 0.01
  %v351 = vmul.f32 %v325, 0.01
  %v352 = vmul.f32 %v328, 0.01
  %v353 = vmul.f32 %v333, 0.01
  %v354 = vmul.f32 %v336, 0.01
  %v355 = vsel %vm339, %v309, %v347
  %v356 = vsel %vm340, %v312, %v348
  %v357 = vsel %vm341, %v317, %v349
  %v358 = vsel %vm342, %v320, %v350
  %v359 = vsel %vm343, %v325, %v351
  %v360 = vsel %vm344, %v328, %v352
  %v361 = vsel %vm345, %v333, %v353
  %v362 = vsel %vm346, %v336, %v354
  %v363 = vpack.c.bf16 %v356, %v355
  %v364 = vpack.c.bf16 %v358, %v357
  %v365 = vpack.c.bf16 %v360, %v359
  %v366 = vpack.c.bf16 %v362, %v361
  %v367 = vld [vmem:[%s5] sm:$0xf]
  %v368 = vld [vmem:[%s5 + $0x4] sm:$0xf]
  %v369 = vld [vmem:[%s5 + $0x8] sm:$0xf]
  %v370 = vld [vmem:[%s5 + $0xc] sm:$0xf]
  %v371 = vld [vmem:[%s5 + $0x10] sm:$0xf]
  %v372 = vld [vmem:[%s5 + $0x14] sm:$0xf]
  %v373 = vld [vmem:[%s5 + $0x18] sm:$0xf]
  %v374 = vld [vmem:[%s5 + $0x1c] sm:$0xf]
  %v375 = vld [vmem:[%s5 + $0x20] sm:$0xf]
  %v376 = vld [vmem:[%s5 + $0x24] sm:$0xf]
  %v377 = vld [vmem:[%s5 + $0x28] sm:$0xf]
  %v378 = vld [vmem:[%s5 + $0x2c] sm:$0xf]
  %v379 = vld [vmem:[%s5 + $0x30] sm:$0xf]
  %v380 = vld [vmem:[%s5 + $0x34] sm:$0xf]
  %v381 = vld [vmem:[%s5 + $0x38] sm:$0xf]
  %v382 = vld [vmem:[%s5 + $0x3c] sm:$0xf]
  %v383 = vld [vmem:[%s6] sm:$0x1]
  %v385 = vlaneseq
  %v386 = vshrl.u32 %v385, 7
  %v387 = vsub.s32 0, %v386
  %v388 = vrot.slane %v383, %v387
  %v406 = vunpack.c.l.b16 %v367
  %v407 = vunpack.c.l.b16 %v368
  %v408 = vunpack.c.l.b16 %v369
  %v409 = vunpack.c.l.b16 %v370
  %v410 = vunpack.c.l.b16 %v371
  %v411 = vunpack.c.l.b16 %v372
  %v412 = vunpack.c.l.b16 %v373
  %v413 = vunpack.c.l.b16 %v374
  %v414 = vunpack.c.l.b16 %v375
  %v415 = vunpack.c.l.b16 %v376
  %v416 = vunpack.c.l.b16 %v377
  %v417 = vunpack.c.l.b16 %v378
  %v418 = vunpack.c.l.b16 %v379
  %v419 = vunpack.c.l.b16 %v380
  %v420 = vunpack.c.l.b16 %v381
  %v421 = vunpack.c.l.b16 %v382
  %v422 = vpack.c.b16 %v407, %v406
  %v423 = vpack.c.b16 %v409, %v408
  %v424 = vpack.c.b16 %v411, %v410
  %v425 = vpack.c.b16 %v413, %v412
  %v426 = vpack.c.b16 %v415, %v414
  %v427 = vpack.c.b16 %v417, %v416
  %v428 = vpack.c.b16 %v419, %v418
  %v429 = vpack.c.b16 %v421, %v420
  %438 = vmatprep.subr.bf16.mxu0 0
  %439 = vmatpush1.bf16.msra.mxu0 %v422
  %440 = vmatprep.subr.bf16.mxu0 0
  %441 = vmatpush1.bf16.msra.mxu0 %v423
  %442 = vmatprep.subr.bf16.mxu0 0
  %443 = vmatpush1.bf16.msra.mxu0 %v424
  %444 = vmatprep.subr.bf16.mxu0 0
  %445 = vmatpush1.bf16.msra.mxu0 %v425
  %446 = vmatprep.subr.bf16.mxu0 0
  %447 = vmatpush1.bf16.msra.mxu0 %v426
  %448 = vmatprep.subr.bf16.mxu0 0
  %449 = vmatpush1.bf16.msra.mxu0 %v427
  %450 = vmatprep.subr.bf16.mxu0 0
  %451 = vmatpush1.bf16.msra.mxu0 %v428
  %452 = vmatprep.subr.bf16.mxu0 0
  %453 = vmatpush1.bf16.msra.mxu0 %v429
  %454 = vmatprep.subr.bf16.mxu0 0
  %455 = vmatpush1.bf16.msra.mxu0 0
  %456 = vmatprep.subr.bf16.mxu0 0
  %457 = vmatpush1.bf16.msra.mxu0 0
  %458 = vmatprep.subr.bf16.mxu0 0
  %459 = vmatpush1.bf16.msra.mxu0 0
  %460 = vmatprep.subr.bf16.mxu0 0
  %461 = vmatpush1.bf16.msra.mxu0 0
  %462 = vmatprep.subr.bf16.mxu0 0
  %463 = vmatpush1.bf16.msra.mxu0 0
  %464 = vmatprep.subr.bf16.mxu0 0
  %465 = vmatpush1.bf16.msra.mxu0 0
  %466 = vmatprep.subr.bf16.mxu0 0
  %467 = vmatpush1.bf16.msra.mxu0 0
  %468 = vmatprep.subr.bf16.mxu0 0
  %469 = vmatpush1.bf16.msra.mxu0 0
  %470 = vmatprep.mubr.bf16.mxu0 0
  %471 = vmatmul.mubr.bf16.gmra.mrb[0].mxu0 %v363
  %v472 = vpop.f32.mrb[0].mxu0
  %v473 = vadd.f32 %v388, %v472
  %v474 = vpop.f32.mrb[0].mxu0
  %v475 = vpop.f32.mrb[0].mxu0
  %v476 = vadd.f32 %v388, %v475
  %v477 = vpop.f32.mrb[0].mxu0
  %478 = vmatprep.mubr.bf16.mxu0 0
  %479 = vmatmul.mubr.bf16.gmra.mrb[0].mxu0 %v364
  %v480 = vpop.f32.mrb[0].mxu0
  %v481 = vadd.f32 %v388, %v480
  %v482 = vpop.f32.mrb[0].mxu0
  %v483 = vpop.f32.mrb[0].mxu0
  %v484 = vadd.f32 %v388, %v483
  %v485 = vpop.f32.mrb[0].mxu0
  %486 = vmatprep.mubr.bf16.mxu0 0
  %487 = vmatmul.mubr.bf16.gmra.mrb[0].mxu0 %v365
  %v488 = vpop.f32.mrb[0].mxu0
  %v489 = vadd.f32 %v388, %v488
  %v490 = vpop.f32.mrb[0].mxu0
  %v491 = vpop.f32.mrb[0].mxu0
  %v492 = vadd.f32 %v388, %v491
  %v493 = vpop.f32.mrb[0].mxu0
  %494 = vmatprep.mubr.bf16.mxu0 0
  %495 = vmatmul.mubr.bf16.gmra.mrb[0].mxu0 %v366
  %v496 = vpop.f32.mrb[0].mxu0
  %v497 = vadd.f32 %v388, %v496
  %v498 = vpop.f32.mrb[0].mxu0
  %v499 = vpop.f32.mrb[0].mxu0
  %v500 = vadd.f32 %v388, %v499
  %v501 = vpop.f32.mrb[0].mxu0
  %502 = vdwg.mxu0
  %503 = vst [vmem:[%s7] sm:$0xff] %v473
  %504 = vst [vmem:[%s7 + $0x8] sm:$0xff] %v476
  %505 = vst [vmem:[%s7 + $0x10] sm:$0xff] %v481
  %506 = vst [vmem:[%s7 + $0x18] sm:$0xff] %v484
  %507 = vst [vmem:[%s7 + $0x20] sm:$0xff] %v489
  %508 = vst [vmem:[%s7 + $0x28] sm:$0xff] %v492
  %509 = vst [vmem:[%s7 + $0x30] sm:$0xff] %v497
  %510 = vst [vmem:[%s7 + $0x38] sm:$0xff] %v500
  // Predicated region
  $region30: #{_mlp_forward_resident.1} parent=0 // pred_check
    _
  $region31: #{_mlp_forward_resident.1} parent=0 // pred_check_branch
    %512 = sbr.rel (0) target = $region33
  $region32: #{_mlp_forward_resident.1} parent=0 // pred_region
    _
  $region33: #{_mlp_forward_resident.1} parent=0 // pred_fallthru
    _
  // Predicated region
  $region34: #{_mlp_forward_resident.1} parent=0 // pred_check
    _
  $region35: #{_mlp_forward_resident.1} parent=0 // pred_check_branch
    %514 = sbr.rel (0) target = $region37
  $region36: #{_mlp_forward_resident.1} parent=0 // pred_region
    _
  $region37: #{_mlp_forward_resident.1} parent=0 // pred_fallthru
    _

</llo_original>
